<compile_context>
chip_gen: v6e
topology: v6e:2x2x1
jax: 0.10.0
libtpu: 0.0.40
codegen_flags: <defaults>
</compile_context>

<pallas_src>
import functools
import math

import jax
import jax.numpy as jnp
from jax.experimental import pallas as pl
from jax.experimental.pallas import tpu as pltpu


def _round_up(x, m):
    return (x + m - 1) // m * m


def _default_tile_m():
    """Per-generation M tile: bigger tiles amortize the ~0.35 us per-grid-step
    overhead; cap at 1024 where the scoped-VMEM default is only 16 MiB."""
    try:
        kind = jax.devices()[0].device_kind.lower()
    except Exception:
        return 1024
    if any(tag in kind for tag in ("v7", "v6", "v5p")):
        return 2048
    return 1024


def _choose_tile_m(M, tile_m):
    """Pick the M tile: multiple of 8, and nudge the grid length to be even so
    the 'parallel' M axis splits evenly across 2 TensorCores (v7x megacore)."""
    if M <= tile_m:
        return M                              # single full-M block (always legal)
    tm = max(8, _round_up(tile_m, 8))
    grid = -(-M // tm)
    if grid > 1 and grid % 2 == 1:
        alt = max(8, _round_up(-(-M // (grid + 1)), 8))
        if -(-M // alt) % 2 == 0:
            tm = alt
    return tm


def _patch_embed_kernel(x_ref, w_ref, b_ref, o_ref):
    # (TM, K) bf16 @ (K, E_pad) bf16 -> f32 accumulation on the MXU,
    # f32 bias add, cast to the requested output dtype (lane-dense store).
    acc = jnp.dot(x_ref[...], w_ref[...], preferred_element_type=jnp.float32)
    o_ref[...] = (acc + b_ref[...]).astype(o_ref.dtype)


def _patch_projection(patches, w_flat, bias, *, out_dtype=jnp.float32,
                      compute_dtype=jnp.bfloat16, tile_m=None):
    """(M, K) @ (K, E) + bias, M-tiled with the weight/bias resident in VMEM."""
    M, K = patches.shape
    E = w_flat.shape[1]

    patches = patches.astype(compute_dtype)
    w = w_flat.astype(compute_dtype)
    b = bias.reshape(1, E).astype(jnp.float32)

    # Pad E only (keeps output stores unmasked); K blocks use the full dim, so
    # unaligned K needs no extra HBM copy of the activations.
    E_pad = _round_up(E, 128)
    if E_pad != E:
        w = jnp.pad(w, ((0, 0), (0, E_pad - E)))
        b = jnp.pad(b, ((0, 0), (0, E_pad - E)))

    tm = _choose_tile_m(M, tile_m if tile_m is not None else _default_tile_m())
    grid_m = pl.cdiv(M, tm)

    act_bytes = patches.dtype.itemsize
    w_bytes = w.dtype.itemsize
    out_bytes = jnp.dtype(out_dtype).itemsize

    # Double-buffered activation/output tiles + (2 allocated) weight buffers.
    vmem_need = (2 * tm * K * act_bytes
                 + 2 * K * E_pad * w_bytes
                 + 2 * E_pad * 4
                 + 2 * tm * E_pad * out_bytes)
    vmem_limit = int(min(64 << 20, max(16 << 20, vmem_need * 1.25 + (2 << 20))))

    cost = pl.CostEstimate(
        flops=2 * M * K * E_pad,
        transcendentals=0,
        bytes_accessed=(M * K * act_bytes + K * E_pad * w_bytes
                        + E_pad * 4 + M * E_pad * out_bytes))

    out = pl.pallas_call(
        _patch_embed_kernel,
        out_shape=jax.ShapeDtypeStruct((M, E_pad), out_dtype),
        grid=(grid_m,),
        in_specs=[
            pl.BlockSpec((tm, K), lambda i: (i, 0)),     # activation tile
            pl.BlockSpec((K, E_pad), lambda i: (0, 0)),  # resident weight
            pl.BlockSpec((1, E_pad), lambda i: (0, 0)),  # resident bias
        ],
        out_specs=pl.BlockSpec((tm, E_pad), lambda i: (i, 0)),
        compiler_params=pltpu.CompilerParams(
            dimension_semantics=("parallel",),
            vmem_limit_bytes=vmem_limit),
        cost_estimate=cost,
    )(patches, w, b)

    if E_pad != E:
        out = out[:, :E]
    return out


def patch_embed_conv2d_forward(x, weight, bias, patch_size, *,
                               out_dtype=jnp.float32, tile_m=None,
                               compute_dtype=jnp.bfloat16):
    """PatchEmbed forward, conv_type='Conv2d'.

    x:      (B, T, C, H, W) f32     weight: (E, C, p, p)    bias: (E,)
    returns (B*T, Hp*Wp, E)
    """
    B, T, C, H, W = x.shape
    p = patch_size
    E = weight.shape[0]
    Hp, Wp = H // p, W // p
    M = B * T * Hp * Wp
    K = C * p * p

    # Patchify in bf16 (single fused XLA pass: cast + transpose), matching
    # Conv2d's (c, kh, kw) contraction order.
    xr = x.astype(compute_dtype).reshape(B * T, C, Hp, p, Wp, p)
    xr = jnp.transpose(xr, (0, 2, 4, 1, 3, 5))          # (BT, Hp, Wp, C, p, p)
    patches = xr.reshape(M, K)

    w_flat = weight.reshape(E, K).T                     # (K, E), k = (c, kh, kw)
    out = _patch_projection(patches, w_flat, bias, out_dtype=out_dtype,
                            compute_dtype=compute_dtype, tile_m=tile_m)
    return out.reshape(B * T, Hp * Wp, E)


def patch_embed_conv3d_forward(x, weight, bias, patch_size, tube_size, *,
                               out_dtype=jnp.float32, tile_m=None,
                               compute_dtype=jnp.bfloat16):
    """PatchEmbed forward, conv_type='Conv3d' (ViViTModel3 default).

    x:      (B, T, C, H, W) f32     weight: (E, C, tube, p, p)    bias: (E,)
    returns (B*(T//tube), Hp*Wp, E)
    """
    B, T, C, H, W = x.shape
    p, tube = patch_size, tube_size
    E = weight.shape[0]
    Tt = T // tube
    Hp, Wp = H // p, W // p
    M = B * Tt * Hp * Wp
    K = C * tube * p * p

    xr = x.astype(compute_dtype).reshape(B, Tt, tube, C, Hp, p, Wp, p)
    xr = jnp.transpose(xr, (0, 1, 4, 6, 3, 2, 5, 7))    # (B,Tt,Hp,Wp,C,tube,p,p)
    patches = xr.reshape(M, K)

    w_flat = weight.reshape(E, K).T                     # k = (c, kt, kh, kw)
    out = _patch_projection(patches, w_flat, bias, out_dtype=out_dtype,
                            compute_dtype=compute_dtype, tile_m=tile_m)
    return out.reshape(B * Tt, Hp * Wp, E)


def init_patch_embed_params(key, in_channels, embed_dims, patch_size,
                            tube_size=None):
    """kaiming_normal_(mode='fan_in', nonlinearity='relu') weight, zero bias
    (matching PatchEmbed.init_weights in the PyTorch module)."""
    if tube_size is None:
        w_shape = (embed_dims, in_channels, patch_size, patch_size)
    else:
        w_shape = (embed_dims, in_channels, tube_size, patch_size, patch_size)
    fan_in = in_channels * patch_size * patch_size * (tube_size or 1)
    std = math.sqrt(2.0 / fan_in)
    weight = std * jax.random.normal(key, w_shape, dtype=jnp.float32)
    bias = jnp.zeros((embed_dims,), dtype=jnp.float32)
    return weight, bias


if __name__ == "__main__":
    # Small shapes consistent with the module's forward:
    # img_size=16, patch_size=8, in_channels=3, embed_dims=32, B=2, T=2.
    B, T, C, H, W = 2, 2, 3, 16, 16
    patch_size = 8
    embed_dims = 32
    tube_size = 2

    key = jax.random.PRNGKey(0)
    kx, kw2, kw3 = jax.random.split(key, 3)
    x = jax.random.normal(kx, (B, T, C, H, W), dtype=jnp.float32)

    Hp, Wp = H // patch_size, W // patch_size

    # ---------------- Conv2d path ----------------
    w2, b2 = init_patch_embed_params(kw2, C, embed_dims, patch_size)
    fwd2 = jax.jit(functools.partial(patch_embed_conv2d_forward,
                                     patch_size=patch_size))
    out2 = jax.block_until_ready(fwd2(x, w2, b2))

    M2 = B * T * Hp * Wp
    K2 = C * patch_size * patch_size

    def patchify2(a):
        ar = a.reshape(B * T, C, Hp, patch_size, Wp, patch_size)
        ar = jnp.transpose(ar, (0, 2, 4, 1, 3, 5))
        return ar.reshape(M2, K2)

    wf2 = w2.reshape(embed_dims, K2).T
    ref2_f32 = (patchify2(x) @ wf2 + b2).reshape(B * T, Hp * Wp, embed_dims)
    p2_bf = patchify2(x.astype(jnp.bfloat16)).astype(jnp.float32)
    ref2_bf = (p2_bf @ wf2.astype(jnp.bfloat16).astype(jnp.float32)
               + b2).reshape(B * T, Hp * Wp, embed_dims)

    assert out2.shape == (B * T, Hp * Wp, embed_dims)
    assert out2.dtype == jnp.float32
    assert jnp.allclose(out2, ref2_bf, atol=1e-2, rtol=1e-2), "conv2d: mismatch vs bf16-input reference"
    assert jnp.allclose(out2, ref2_f32, atol=6e-2, rtol=6e-2), "conv2d: mismatch vs f32 reference"

    # ---------------- Conv3d path (ViViTModel3 default) ----------------
    w3, b3 = init_patch_embed_params(kw3, C, embed_dims, patch_size, tube_size)
    fwd3 = jax.jit(functools.partial(patch_embed_conv3d_forward,
                                     patch_size=patch_size, tube_size=tube_size))
    out3 = jax.block_until_ready(fwd3(x, w3, b3))

    Tt = T // tube_size
    M3 = B * Tt * Hp * Wp
    K3 = C * tube_size * patch_size * patch_size

    def patchify3(a):
        ar = a.reshape(B, Tt, tube_size, C, Hp, patch_size, Wp, patch_size)
        ar = jnp.transpose(ar, (0, 1, 4, 6, 3, 2, 5, 7))
        return ar.reshape(M3, K3)

    wf3 = w3.reshape(embed_dims, K3).T
    ref3_f32 = (patchify3(x) @ wf3 + b3).reshape(B * Tt, Hp * Wp, embed_dims)
    p3_bf = patchify3(x.astype(jnp.bfloat16)).astype(jnp.float32)
    ref3_bf = (p3_bf @ wf3.astype(jnp.bfloat16).astype(jnp.float32)
               + b3).reshape(B * Tt, Hp * Wp, embed_dims)

    assert out3.shape == (B * Tt, Hp * Wp, embed_dims)
    assert out3.dtype == jnp.float32
    assert jnp.allclose(out3, ref3_bf, atol=1e-2, rtol=1e-2), "conv3d: mismatch vs bf16-input reference"
    assert jnp.allclose(out3, ref3_f32, atol=6e-2, rtol=6e-2), "conv3d: mismatch vs f32 reference"

    print("KERNEL_OK")
</pallas_src>

<mosaic_0001>
module attributes {stable_mosaic.version = 11 : i64} {
  func.func @_patch_embed_kernel(%arg0: i32, %arg1: memref<16x192xbf16, #tpu.memory_space<vmem>>, %arg2: memref<192x128xbf16, #tpu.memory_space<vmem>>, %arg3: memref<1x128xf32, #tpu.memory_space<vmem>>, %arg4: memref<16x128xf32, #tpu.memory_space<vmem>>) attributes {dimension_semantics = [#tpu.dimension_semantics<parallel>], iteration_bounds = array<i64: 1>, scalar_prefetch = 0 : i64, scratch_operands = 0 : i64, tpu.core_type = #tpu.core_type<tc>, window_params = [{transform_indices = @transform_0, window_bounds = array<i64: 16, 192>}, {pipeline_mode = #tpu.pipeline_mode<synchronous>, transform_indices = @transform_1, window_bounds = array<i64: 192, 128>}, {pipeline_mode = #tpu.pipeline_mode<synchronous>, transform_indices = @transform_2, window_bounds = array<i64: 1, 128>}, {transform_indices = @transform_3, window_bounds = array<i64: 16, 128>}]} {
    %c0 = arith.constant 0 : index
    %c0_0 = arith.constant 0 : index
    %0 = vector.load %arg1[%c0, %c0_0] : memref<16x192xbf16, #tpu.memory_space<vmem>>, vector<16x192xbf16>
    %c0_1 = arith.constant 0 : index
    %c0_2 = arith.constant 0 : index
    %1 = vector.load %arg2[%c0_1, %c0_2] : memref<192x128xbf16, #tpu.memory_space<vmem>>, vector<192x128xbf16>
    %cst = arith.constant dense<0.000000e+00> : vector<16x128xf32>
    %2 = tpu.matmul %0, %1, %cst {dimension_numbers = #tpu.dot_dimension_numbers<[1], [0], [0], [1], [0, 0, 1, 1], [], []>} : vector<16x192xbf16>, vector<192x128xbf16>, vector<16x128xf32> -> vector<16x128xf32>
    %c0_3 = arith.constant 0 : index
    %c0_4 = arith.constant 0 : index
    %3 = vector.load %arg3[%c0_3, %c0_4] : memref<1x128xf32, #tpu.memory_space<vmem>>, vector<1x128xf32>
    %4 = vector.broadcast %3 : vector<1x128xf32> to vector<16x128xf32>
    %5 = arith.addf %2, %4 : vector<16x128xf32>
    %c0_5 = arith.constant 0 : index
    %c0_6 = arith.constant 0 : index
    %6 = vector.load %arg4[%c0_5, %c0_6] : memref<16x128xf32, #tpu.memory_space<vmem>>, vector<16x128xf32>
    tpu.vector_store %arg4[%c0_5, %c0_6], %5 {strides = array<i32>} : memref<16x128xf32, #tpu.memory_space<vmem>>, vector<16x128xf32>,
    return
  }
  func.func @transform_0(%arg0: i32) -> (i32, i32) {
    %c0_i32 = arith.constant 0 : i32
    %c0_i32_0 = arith.constant 0 : i32
    return %arg0, %c0_i32 : i32, i32
  }
  func.func @transform_1(%arg0: i32) -> (i32, i32) {
    %c0_i32 = arith.constant 0 : i32
    %c0_i32_0 = arith.constant 0 : i32
    %c0_i32_1 = arith.constant 0 : i32
    return %c0_i32, %c0_i32_0 : i32, i32
  }
  func.func @transform_2(%arg0: i32) -> (i32, i32) {
    %c0_i32 = arith.constant 0 : i32
    %c0_i32_0 = arith.constant 0 : i32
    %c0_i32_1 = arith.constant 0 : i32
    return %c0_i32, %c0_i32_0 : i32, i32
  }
  func.func @transform_3(%arg0: i32) -> (i32, i32) {
    %c0_i32 = arith.constant 0 : i32
    %c0_i32_0 = arith.constant 0 : i32
    return %arg0, %c0_i32 : i32, i32
  }
}

</mosaic_0001>

<llo_original>
// kernel: patch_embed_conv2d_forward.1
$region0: #{patch_embed_conv2d_forward.1}
  #allocation0 [shape = 'u32[]', space=smem, size = 0x4, offset = 0x4, fixed_abs, tag = 'smem constant byte address 0x4 - core index']
  #allocation1 [shape = 'u32[144,128]{1,0:T(1,128)}', space=vmem, size = 0x12000, scoped, tag = 'internal scratch']
  %s0 = inlined_call_operand.vmem [shape: bf16[16,192], index: 0, kind: input, shape index: {}]
  %s1 = inlined_call_operand.vmem [shape: bf16[192,128], index: 1, kind: input, shape index: {}]
  %s2 = inlined_call_operand.vmem [shape: f32[1,128], index: 2, kind: input, shape index: {}]
  %s3 = inlined_call_operand.hbm [shape: f32[16,128], index: 3, kind: output, shape index: {}]
  %s4 = sld [smem:[#allocation0]]
  $region22: #{patch_embed_conv2d_forward.1} parent=0
    _
  %s6 = ssub.s32 1, %s4
  %s7 = scalar_select 0, %s6, %s4
  $region1: #{patch_embed_conv2d_forward.1} parent=0
    #allocation2 [shape = 'u8[8192]{0}', space=vmem, size = 0x2000, scoped, tag = 'output window, operand 0, single buffered']
    #allocation3 [shape = 's32[1]{0}', space=sflag, size = 0x4, scoped, tag = 'scoped memory for patch_embed_conv2d_forward.1']
    %8 = vsyncpa [#allocation3], 0
    // Predicated region
    $region2: #{patch_embed_conv2d_forward.1} parent=1 // pred_check
      _
    $region3: #{patch_embed_conv2d_forward.1} parent=1 // pred_check_branch
      %10 = sbr.rel (0) target = $region5
    $region4: #{patch_embed_conv2d_forward.1} parent=1 // pred_region
      _
    $region5: #{patch_embed_conv2d_forward.1} parent=1 // pred_fallthru
      _
    // Predicated region
    $region6: #{patch_embed_conv2d_forward.1} parent=1 // pred_check
      _
    $region7: #{patch_embed_conv2d_forward.1} parent=1 // pred_check_branch
      %12 = sbr.rel (0) target = $region9
    $region8: #{patch_embed_conv2d_forward.1} parent=1 // pred_region
      _
    $region9: #{patch_embed_conv2d_forward.1} parent=1 // pred_fallthru
      _
    // Predicated region
    $region10: #{patch_embed_conv2d_forward.1} parent=1 // pred_check
      _
    $region11: #{patch_embed_conv2d_forward.1} parent=1 // pred_check_branch
      %14 = sbr.rel (0) target = $region13
    $region12: #{patch_embed_conv2d_forward.1} parent=1 // pred_region
      _
    $region13: #{patch_embed_conv2d_forward.1} parent=1 // pred_fallthru
      _
    %v16 = vld [vmem:[%s0] sm:$0xff]
    %v17 = vld [vmem:[%s0 + $0x8] sm:$0xff]
    %v18 = vld [vmem:[%s1] sm:$0xf]
    %v19 = vld [vmem:[%s1 + $0x4] sm:$0xf]
    %v20 = vld [vmem:[%s1 + $0x8] sm:$0xf]
    %v21 = vld [vmem:[%s1 + $0xc] sm:$0xf]
    %v22 = vld [vmem:[%s1 + $0x10] sm:$0xf]
    %v23 = vld [vmem:[%s1 + $0x14] sm:$0xf]
    %v24 = vld [vmem:[%s1 + $0x18] sm:$0xf]
    %v25 = vld [vmem:[%s1 + $0x1c] sm:$0xf]
    %v26 = vld [vmem:[%s1 + $0x20] sm:$0xf]
    %v27 = vld [vmem:[%s1 + $0x24] sm:$0xf]
    %v28 = vld [vmem:[%s1 + $0x28] sm:$0xf]
    %v29 = vld [vmem:[%s1 + $0x2c] sm:$0xf]
    %v30 = vld [vmem:[%s1 + $0x30] sm:$0xf]
    %v31 = vld [vmem:[%s1 + $0x34] sm:$0xf]
    %v32 = vld [vmem:[%s1 + $0x38] sm:$0xf]
    %v33 = vld [vmem:[%s1 + $0x3c] sm:$0xf]
    %v34 = vld [vmem:[%s1 + $0x40] sm:$0xf]
    %v35 = vld [vmem:[%s1 + $0x44] sm:$0xf]
    %v36 = vld [vmem:[%s1 + $0x48] sm:$0xf]
    %v37 = vld [vmem:[%s1 + $0x4c] sm:$0xf]
    %v38 = vld [vmem:[%s1 + $0x50] sm:$0xf]
    %v39 = vld [vmem:[%s1 + $0x54] sm:$0xf]
    %v40 = vld [vmem:[%s1 + $0x58] sm:$0xf]
    %v41 = vld [vmem:[%s1 + $0x5c] sm:$0xf]
    %v42 = vld [vmem:[%s2] sm:$0x1]
    %v44 = vlaneseq
    %v45 = vshrl.u32 %v44, 7
    %v46 = vsub.s32 0, %v45
    %v47 = vrot.slane %v42, %v46
    %v51 = vunpack.c.l.b16 %v16
    %v52 = vunpack.c.h.b16 %v16
    %v53 = vunpack.c.l.b16 %v17
    %v54 = vunpack.c.h.b16 %v17
    %v55 = vpack.c.b16 %v53, %v51
    %v56 = vpack.c.b16 %v54, %v52
    %v82 = vunpack.c.l.b16 %v18
    %v83 = vunpack.c.l.b16 %v19
    %v84 = vunpack.c.l.b16 %v20
    %v85 = vunpack.c.l.b16 %v21
    %v86 = vunpack.c.l.b16 %v22
    %v87 = vunpack.c.l.b16 %v23
    %v88 = vunpack.c.l.b16 %v24
    %v89 = vunpack.c.l.b16 %v25
    %v90 = vunpack.c.l.b16 %v26
    %v91 = vunpack.c.l.b16 %v27
    %v92 = vunpack.c.l.b16 %v28
    %v93 = vunpack.c.l.b16 %v29
    %v94 = vunpack.c.l.b16 %v30
    %v95 = vunpack.c.l.b16 %v31
    %v96 = vunpack.c.l.b16 %v32
    %v97 = vunpack.c.l.b16 %v33
    %v98 = vunpack.c.l.b16 %v34
    %v99 = vunpack.c.l.b16 %v35
    %v100 = vunpack.c.l.b16 %v36
    %v101 = vunpack.c.l.b16 %v37
    %v102 = vunpack.c.l.b16 %v38
    %v103 = vunpack.c.l.b16 %v39
    %v104 = vunpack.c.l.b16 %v40
    %v105 = vunpack.c.l.b16 %v41
    %v106 = vpack.c.b16 %v83, %v82
    %v107 = vpack.c.b16 %v85, %v84
    %v108 = vpack.c.b16 %v87, %v86
    %v109 = vpack.c.b16 %v89, %v88
    %v110 = vpack.c.b16 %v91, %v90
    %v111 = vpack.c.b16 %v93, %v92
    %v112 = vpack.c.b16 %v95, %v94
    %v113 = vpack.c.b16 %v97, %v96
    %v114 = vpack.c.b16 %v99, %v98
    %v115 = vpack.c.b16 %v101, %v100
    %v116 = vpack.c.b16 %v103, %v102
    %v117 = vpack.c.b16 %v105, %v104
    %vm130 = vcmask 523264
    %v132 = vsel %vm130, %v56, 0
    %134 = vmatprep.subr.bf16.mxu0 0
    %135 = vmatpush1.bf16.msra.mxu0 %v113
    %136 = vmatprep.subr.bf16.mxu0 0
    %137 = vmatpush1.bf16.msra.mxu0 %v112
    %138 = vmatprep.subr.bf16.mxu0 0
    %139 = vmatpush1.bf16.msra.mxu0 %v111
    %140 = vmatprep.subr.bf16.mxu0 0
    %141 = vmatpush1.bf16.msra.mxu0 %v110
    %142 = vmatprep.subr.bf16.mxu0 0
    %143 = vmatpush1.bf16.msra.mxu0 %v109
    %144 = vmatprep.subr.bf16.mxu0 0
    %145 = vmatpush1.bf16.msra.mxu0 %v108
    %146 = vmatprep.subr.bf16.mxu0 0
    %147 = vmatpush1.bf16.msra.mxu0 %v107
    %148 = vmatprep.subr.bf16.mxu0 0
    %149 = vmatpush1.bf16.msra.mxu0 %v106
    %150 = vmatprep.subr.bf16.mxu0 0
    %151 = vmatpush2.bf16.msra.mxu0 0
    %152 = vmatprep.subr.bf16.mxu0 0
    %153 = vmatpush2.bf16.msra.mxu0 0
    %154 = vmatprep.subr.bf16.mxu0 0
    %155 = vmatpush2.bf16.msra.mxu0 0
    %156 = vmatprep.subr.bf16.mxu0 0
    %157 = vmatpush2.bf16.msra.mxu0 0
    %158 = vmatprep.subr.bf16.mxu0 0
    %159 = vmatpush2.bf16.msra.mxu0 %v117
    %160 = vmatprep.subr.bf16.mxu0 0
    %161 = vmatpush2.bf16.msra.mxu0 %v116
    %162 = vmatprep.subr.bf16.mxu0 0
    %163 = vmatpush2.bf16.msra.mxu0 %v115
    %164 = vmatprep.subr.bf16.mxu0 0
    %165 = vmatpush2.bf16.msra.mxu0 %v114
    %166 = vmatprep.mubr.bf16.mxu0 %v132
    %167 = vmatmul.mubr.bf16.gmra.mxu0 %v55
    %v168 = vpop.f32.mrf.mxu0
    %v169 = vadd.f32 %v47, %v168
    %v170 = vpop.f32.mrf.mxu0
    %v171 = vpop.f32.mrf.mxu0
    %v172 = vadd.f32 %v47, %v171
    %v173 = vpop.f32.mrf.mxu0
    %174 = vdwg.mxu0
    %175 = vst [vmem:[#allocation2] sm:$0xff] %v169
    %176 = vst [vmem:[#allocation2 + $0x8] sm:$0xff] %v172
    // Predicated region
    $region14: #{patch_embed_conv2d_forward.1} parent=1 // pred_check
      _
    $region15: #{patch_embed_conv2d_forward.1} parent=1 // pred_check_branch
      %178 = sbr.rel (0) target = $region17
    $region16: #{patch_embed_conv2d_forward.1} parent=1 // pred_region
      %s180 = ssub.s32 256, 256
      %181 = vsyncadd [#allocation3], %s180
      %s182 = sshll.u32 [#allocation2], 4
      %s183 = int_to_ptr.vmem [resolvable:$true] %s182
      %188 = dma.vmem_to_hbm [thread:$0]  %s183, 256, %s3, [#allocation3], 128, 128, 8
    $region17: #{patch_embed_conv2d_forward.1} parent=1 // pred_fallthru
      _
    // Predicated region
    $region18: #{patch_embed_conv2d_forward.1} parent=1 // pred_check
      _
    $region19: #{patch_embed_conv2d_forward.1} parent=1 // pred_check_branch
      %190 = sbr.rel (0) target = $region21
    $region20: #{patch_embed_conv2d_forward.1} parent=1 // pred_region
      %191 = dma.done [#allocation3], 256
    $region21: #{patch_embed_conv2d_forward.1} parent=1 // pred_fallthru
      _
    %192 = vsyncpa [#allocation3], 1

</llo_original>
